<compile_context>
chip_gen: v6e
topology: v6e:2x2x1
jax: 0.10.0
libtpu: 0.0.40
codegen_flags: <defaults>
</compile_context>

<pallas_src>
import numpy as np
import jax
import jax.numpy as jnp
from jax.experimental import pallas as pl
from jax.experimental.pallas import tpu as pltpu


def _fourier_bias_matmul_kernel(row_ref, col_ref, out_ref):
    # row_ref: (1, TI, K2)   col_ref: (1, K2, TJ)   out_ref: (1, TI, TJ)
    out_ref[0, :, :] = jnp.dot(
        row_ref[0, :, :], col_ref[0, :, :], preferred_element_type=jnp.float32
    ).astype(out_ref.dtype)


def _tile_size(L, max_tile):
    """Largest hardware-aligned tile <= min(L, max_tile).

    Multiple of 128 when L >= 128 (lane-dense, unmasked stores / full MXU
    passes), multiple of 8 when 8 <= L < 128, and the full extent only when L
    itself is below the alignment unit.
    """
    if L >= 128:
        return min(max_tile, (L // 128) * 128)
    if L >= 8:
        return min(max_tile, (L // 8) * 8)
    return L


def fourier_positional_bias(fractions, W, b, a, scale=10.0,
                            compute_dtype=jnp.float32, out_dtype=jnp.float32):
    """Pallas TPU implementation of FourierPositionalBias.forward."""
    fractions = fractions.astype(jnp.float32)
    B, L = fractions.shape
    F = W.shape[-1]
    w = W.reshape(F).astype(jnp.float32)
    b_param = b.reshape(F).astype(jnp.float32)
    a_param = a.reshape(F).astype(jnp.float32)

    scaled = scale * fractions                                               # (B, L)

    # --- Hoisted O(B*L*F) factor precompute (all transcendentals live here) ---
    # Row factors, natural (B, L, 2F) layout.
    phase = scaled[..., None] * w[None, None, :]                             # (B, L, F)
    row = jnp.concatenate([jnp.cos(phase), jnp.sin(phase)], axis=-1)         # (B, L, 2F)

    # Column factors built directly in transposed (B, 2F, L) layout — avoids a
    # separate XLA transpose pass over HBM before the kernel.
    phase_t = w[None, :, None] * scaled[:, None, :] + b_param[None, :, None]  # (B, F, L)
    col_t = jnp.concatenate(
        [a_param[None, :, None] * jnp.cos(phase_t),
         a_param[None, :, None] * jnp.sin(phase_t)],
        axis=1,
    )                                                                         # (B, 2F, L)

    # Pad the contraction dim (2F) up to a multiple of 8 only (zero columns are
    # harmless in the dot product; padding further would just add zero traffic).
    k2 = 2 * F
    k2p = ((k2 + 7) // 8) * 8
    if k2p != k2:
        row = jnp.pad(row, ((0, 0), (0, 0), (0, k2p - k2)))
        col_t = jnp.pad(col_t, ((0, 0), (0, k2p - k2), (0, 0)))

    row = row.astype(compute_dtype)
    col_t = col_t.astype(compute_dtype)

    # --- Fixed aligned tiles + cdiv grid (Pallas clips partial edge blocks) ---
    ti = _tile_size(L, 512)
    tj = _tile_size(L, 1024)
    grid = (B, pl.cdiv(L, ti), pl.cdiv(L, tj))

    return pl.pallas_call(
        _fourier_bias_matmul_kernel,
        out_shape=jax.ShapeDtypeStruct((B, L, L), out_dtype),
        grid=grid,
        in_specs=[
            # Row factors: constant block over innermost j -> no re-DMA per j step.
            pl.BlockSpec((1, ti, k2p), lambda bi, i, j: (bi, i, 0)),
            # Column factors (pre-transposed), lane-dense tj.
            pl.BlockSpec((1, k2p, tj), lambda bi, i, j: (bi, 0, j)),
        ],
        out_specs=pl.BlockSpec((1, ti, tj), lambda bi, i, j: (bi, i, j)),
        compiler_params=pltpu.CompilerParams(
            dimension_semantics=("parallel", "parallel", "parallel"),
            vmem_limit_bytes=32 * 1024 * 1024,
        ),
    )(row, col_t)


def _reference(fractions, W, b, a, scale=10.0):
    # Pure-JAX mirror of the torch forward, for correctness checking.
    diffs = fractions[:, None, :] - fractions[:, :, None]          # (B, L, L)
    scaled = (diffs * scale)[..., None]                            # (B, L, L, 1)
    rff = jnp.cos(jnp.matmul(scaled, W.reshape(1, -1)) + b)        # (B, L, L, F)
    return jnp.matmul(rff, a)                                      # (B, L, L)


if __name__ == "__main__":
    scale = 10.0
    key = jax.random.PRNGKey(0)
    k_w, k_b, k_a, k_f = jax.random.split(key, 4)

    # Small shapes consistent with the module.
    B, L, F = 2, 8, 32
    W = jax.random.normal(k_w, (1, F), dtype=jnp.float32) * 0.1
    b = jax.random.uniform(k_b, (F,), dtype=jnp.float32) * 2.0 * np.pi
    a = jax.random.normal(k_a, (F,), dtype=jnp.float32)

    fractions = jax.random.uniform(k_f, (B, L), dtype=jnp.float32)
    out = jax.block_until_ready(fourier_positional_bias(fractions, W, b, a, scale=scale))
    ref = _reference(fractions, W, b, a, scale=scale)
    np.testing.assert_allclose(np.asarray(out), np.asarray(ref), rtol=1e-5, atol=1e-4)

    # A non-128-divisible sequence length to exercise the lane-dense cdiv tiling
    # with partial (masked) edge blocks.
    L2 = 200
    fractions2 = jax.random.uniform(jax.random.PRNGKey(1), (B, L2), dtype=jnp.float32)
    out2 = jax.block_until_ready(fourier_positional_bias(fractions2, W, b, a, scale=scale))
    ref2 = _reference(fractions2, W, b, a, scale=scale)
    np.testing.assert_allclose(np.asarray(out2), np.asarray(ref2), rtol=1e-5, atol=1e-4)

    print("KERNEL_OK")
</pallas_src>

<mosaic_0001>
module attributes {stable_mosaic.version = 11 : i64} {
  func.func @_fourier_bias_matmul_kernel(%arg0: i32, %arg1: i32, %arg2: i32, %arg3: memref<1x8x64xf32, #tpu.memory_space<vmem>>, %arg4: memref<1x64x8xf32, #tpu.memory_space<vmem>>, %arg5: memref<1x8x8xf32, #tpu.memory_space<vmem>>) attributes {dimension_semantics = [#tpu.dimension_semantics<parallel>, #tpu.dimension_semantics<parallel>, #tpu.dimension_semantics<parallel>], iteration_bounds = array<i64: 2, 1, 1>, scalar_prefetch = 0 : i64, scratch_operands = 0 : i64, tpu.core_type = #tpu.core_type<tc>, window_params = [{transform_indices = @transform_0, window_bounds = array<i64: 1, 8, 64>}, {transform_indices = @transform_1, window_bounds = array<i64: 1, 64, 8>}, {transform_indices = @transform_2, window_bounds = array<i64: 1, 8, 8>}]} {
    %c0 = arith.constant 0 : index
    %c0_0 = arith.constant 0 : index
    %c0_1 = arith.constant 0 : index
    %0 = vector.load %arg3[%c0, %c0_0, %c0_1] : memref<1x8x64xf32, #tpu.memory_space<vmem>>, vector<1x8x64xf32>
    %1 = vector.shape_cast %0 : vector<1x8x64xf32> to vector<8x64xf32>
    %c0_2 = arith.constant 0 : index
    %c0_3 = arith.constant 0 : index
    %c0_4 = arith.constant 0 : index
    %2 = vector.load %arg4[%c0_2, %c0_3, %c0_4] : memref<1x64x8xf32, #tpu.memory_space<vmem>>, vector<1x64x8xf32>
    %3 = vector.shape_cast %2 : vector<1x64x8xf32> to vector<64x8xf32>
    %cst = arith.constant dense<0.000000e+00> : vector<8x8xf32>
    %4 = tpu.matmul %1, %3, %cst {dimension_numbers = #tpu.dot_dimension_numbers<[1], [0], [0], [1], [0, 0, 1, 1], [], []>} : vector<8x64xf32>, vector<64x8xf32>, vector<8x8xf32> -> vector<8x8xf32>
    %c0_5 = arith.constant 0 : index
    %c0_6 = arith.constant 0 : index
    %c0_7 = arith.constant 0 : index
    %5 = vector.load %arg5[%c0_5, %c0_6, %c0_7] : memref<1x8x8xf32, #tpu.memory_space<vmem>>, vector<1x8x8xf32>
    %6 = vector.shape_cast %5 : vector<1x8x8xf32> to vector<8x8xf32>
    %7 = vector.shape_cast %4 : vector<8x8xf32> to vector<1x8x8xf32>
    tpu.vector_store %arg5[%c0_5, %c0_6, %c0_7], %7 {strides = array<i32>} : memref<1x8x8xf32, #tpu.memory_space<vmem>>, vector<1x8x8xf32>,
    return
  }
  func.func @transform_0(%arg0: i32, %arg1: i32, %arg2: i32) -> (i32, i32, i32) {
    %c0_i32 = arith.constant 0 : i32
    %c0_i32_0 = arith.constant 0 : i32
    return %arg0, %arg1, %c0_i32 : i32, i32, i32
  }
  func.func @transform_1(%arg0: i32, %arg1: i32, %arg2: i32) -> (i32, i32, i32) {
    %c0_i32 = arith.constant 0 : i32
    %c0_i32_0 = arith.constant 0 : i32
    return %arg0, %c0_i32, %arg2 : i32, i32, i32
  }
  func.func @transform_2(%arg0: i32, %arg1: i32, %arg2: i32) -> (i32, i32, i32) {
    %c0_i32 = arith.constant 0 : i32
    return %arg0, %arg1, %arg2 : i32, i32, i32
  }
}

</mosaic_0001>

<llo_original>
// kernel: tpu_custom_call.1
$region0: #{tpu_custom_call.1}
  #allocation0 [shape = 'u32[]', space=smem, size = 0x4, offset = 0x4, fixed_abs, tag = 'smem constant byte address 0x4 - core index']
  #allocation1 [shape = 'u32[144,128]{1,0:T(1,128)}', space=vmem, size = 0x12000, scoped, tag = 'internal scratch']
  %s0 = inlined_call_operand.vmem [shape: f32[2,8,64], index: 0, kind: input, shape index: {}]
  %s1 = inlined_call_operand.vmem [shape: f32[2,64,8], index: 1, kind: input, shape index: {}]
  %s2 = inlined_call_operand.hbm [shape: f32[2,8,8], index: 2, kind: output, shape index: {}]
  %s3 = sld [smem:[#allocation0]]
  $region41: #{tpu_custom_call.1} parent=0
    _
  %s5 = ssub.s32 1, %s3
  %s6 = scalar_select 0, %s5, %s3
  $region1: #{tpu_custom_call.1} parent=0
    #allocation2 [shape = 'u8[8192]{0}', space=vmem, size = 0x2000, scoped, tag = 'output window, operand 0']
    #allocation3 [shape = 's32[2]{0}', space=sflag, size = 0x8, scoped, tag = 'scoped memory for tpu_custom_call.1']
    %7 = vsyncpa [#allocation3], 0
    %s8 = scalar_lea.sflag [#allocation3], 1
    %9 = vsyncpa %s8, 0
    loop: start=0, step=1, limit=4
    $region2: #{tpu_custom_call.1} parent=1 // loop_pre_header
      _
    $region3: #{tpu_custom_call.1} parent=1 // loop_header
      %s11 = sphi 0, %s15
      %p12 = scmp.ge.s32.totalorder %s11, 4
      %s18 = sphi 0, %s37
      %s19 = sphi 0, %s33
      %s20 = sphi 0, %s29
      %s21 = sphi 0, %s18
      %s22 = sphi 0, %s19
      %s23 = sphi 0, %s20
      %s24 = sphi 0, %s21
      %s25 = sphi 0, %s22
      %s26 = sphi 0, %s23
      %s42 = sphi 0, %s44
      %s45 = sphi 0, %s42
      %s46 = sphi 0, %s45
      %s62 = sphi 0, %s46
      %s70 = sphi 0, %s72
      %s73 = sphi 0, %s70
      %s74 = sphi 0, %s73
      %s90 = sphi 0, %s74
      %s100 = sphi 0, %s102
      %s103 = sphi 0, %s100
      %s104 = sphi 0, %s103
      %s120 = sphi 0, %s104
    $region4: #{tpu_custom_call.1} parent=1 // loop_header_branch
      %14 = sbr.rel (%p12) target = $region8
    $region5: #{tpu_custom_call.1} parent=1 // loop_body
      %s16 = ssub.s32 %s11, 1
      %s17 = ssub.s32 %s11, 2
      %s27 = sadd.s32 1, %s20
      %p28 = scmp.ge.s32.totalorder %s27, 1
      %s29 = scalar_select %p28, 0, %s27
      %s30 = sadd.s32 1, %s19
      %s31 = scalar_select %p28, %s30, %s19
      %p32 = scmp.ge.s32.totalorder %s31, 1
      %s33 = scalar_select %p32, 0, %s31
      %s34 = sadd.s32 1, %s18
      %s35 = scalar_select %p32, %s34, %s18
      %p36 = scmp.ge.s32.totalorder %s35, 2
      %s37 = scalar_select %p36, 0, %s35
      %s38 = ssub.s32 %s18, %s37
      %s39 = ssub.s32 %s19, %s33
      %s40 = sor.u32 %s38, %s39
      %p41 = scmp.eq.s32.totalorder %s40, 0
      %s43 = sadd.s32 %s42, 1
      %s44 = scalar_select %p41, %s42, %s43
      %p47 = pneg %p41
      %p48 = scmp.eq.s32.totalorder %s11, 1
      %p49 = por %p47, %p48
      %p50 = scmp.ne.s32.totalorder %s42, %s45
      %p51 = scmp.eq.s32.totalorder %s11, 0
      %p52 = por %p50, %p51
      %p53 = scmp.ne.s32.totalorder %s42, %s45
      %p54 = scmp.eq.s32.totalorder %s16, 1
      %p55 = por %p53, %p54
      %p56 = scmp.ne.s32.totalorder %s45, %s46
      %p57 = scmp.eq.s32.totalorder %s16, 0
      %p58 = por %p56, %p57
      %p59 = scmp.ne.s32.totalorder %s45, %s46
      %p60 = scmp.eq.s32.totalorder %s17, 1
      %p61 = por %p59, %p60
      %p63 = scmp.ne.s32.totalorder %s46, %s62
      %p64 = scmp.eq.s32.totalorder %s17, 0
      %p65 = por %p63, %p64
      %s66 = ssub.s32 %s18, %s37
      %s67 = ssub.s32 %s20, %s29
      %s68 = sor.u32 %s66, %s67
      %p69 = scmp.eq.s32.totalorder %s68, 0
      %s71 = sadd.s32 %s70, 1
      %s72 = scalar_select %p69, %s70, %s71
      %p75 = pneg %p69
      %p76 = scmp.eq.s32.totalorder %s11, 1
      %p77 = por %p75, %p76
      %p78 = scmp.ne.s32.totalorder %s70, %s73
      %p79 = scmp.eq.s32.totalorder %s11, 0
      %p80 = por %p78, %p79
      %p81 = scmp.ne.s32.totalorder %s70, %s73
      %p82 = scmp.eq.s32.totalorder %s16, 1
      %p83 = por %p81, %p82
      %p84 = scmp.ne.s32.totalorder %s73, %s74
      %p85 = scmp.eq.s32.totalorder %s16, 0
      %p86 = por %p84, %p85
      %p87 = scmp.ne.s32.totalorder %s73, %s74
      %p88 = scmp.eq.s32.totalorder %s17, 1
      %p89 = por %p87, %p88
      %p91 = scmp.ne.s32.totalorder %s74, %s90
      %p92 = scmp.eq.s32.totalorder %s17, 0
      %p93 = por %p91, %p92
      %s94 = ssub.s32 %s18, %s37
      %s95 = ssub.s32 %s19, %s33
      %s96 = sor.u32 %s94, %s95
      %s97 = ssub.s32 %s20, %s29
      %s98 = sor.u32 %s96, %s97
      %p99 = scmp.eq.s32.totalorder %s98, 0
      %s101 = sadd.s32 %s100, 1
      %s102 = scalar_select %p99, %s100, %s101
      %p105 = pneg %p99
      %p106 = scmp.eq.s32.totalorder %s11, 1
      %p107 = por %p105, %p106
      %p108 = scmp.ne.s32.totalorder %s100, %s103
      %p109 = scmp.eq.s32.totalorder %s11, 0
      %p110 = por %p108, %p109
      %p111 = scmp.ne.s32.totalorder %s100, %s103
      %p112 = scmp.eq.s32.totalorder %s16, 1
      %p113 = por %p111, %p112
      %p114 = scmp.ne.s32.totalorder %s103, %s104
      %p115 = scmp.eq.s32.totalorder %s16, 0
      %p116 = por %p114, %p115
      %p117 = scmp.ne.s32.totalorder %s103, %s104
      %p118 = scmp.eq.s32.totalorder %s17, 1
      %p119 = por %p117, %p118
      %p121 = scmp.ne.s32.totalorder %s104, %s120
      %p122 = scmp.eq.s32.totalorder %s17, 0
      %p123 = por %p121, %p122
      %p124 = scmp.le.s32.totalorder 1, %s11
      %p125 = scmp.lt.s32.totalorder %s11, 3
      %p126 = pnand %p124, %p125
      %p127 = pneg %p126
      // Predicated region
      $region9: #{tpu_custom_call.1} parent=5 // pred_check
        _
      $region10: #{tpu_custom_call.1} parent=5 // pred_check_branch
        %129 = sbr.rel (%p126) target = $region12
      $region11: #{tpu_custom_call.1} parent=5 // pred_region
        %s130 = ssub.s32 %s11, 1
      $region12: #{tpu_custom_call.1} parent=5 // pred_fallthru
        _
      %p131 = scmp.lt.s32.totalorder %s11, 2
      // Predicated region
      $region13: #{tpu_custom_call.1} parent=5 // pred_check
        %p132 = pneg %p131
      $region14: #{tpu_custom_call.1} parent=5 // pred_check_branch
        %134 = sbr.rel (%p132) target = $region16
      $region15: #{tpu_custom_call.1} parent=5 // pred_region
        // Predicated region
        $region17: #{tpu_custom_call.1} parent=15 // pred_check
          %p135 = pneg %p52
        $region18: #{tpu_custom_call.1} parent=15 // pred_check_branch
          %137 = sbr.rel (%p135) target = $region20
        $region19: #{tpu_custom_call.1} parent=15 // pred_region
          %p138 = scmp.lt.s32.totalorder %s18, 1
          %s139 = scalar_select %p138, %s18, 1
          %p140 = scmp.lt.s32.totalorder %s19, 0
          %s141 = scalar_select %p140, %s19, 0
          %s142 = sadd.s32 %s141, %s139
          %s143 = smul.addr %s142, 8
          %s144 = scalar_lea.vmem %s0, %s143
        $region20: #{tpu_custom_call.1} parent=15 // pred_fallthru
          _
        // Predicated region
        $region21: #{tpu_custom_call.1} parent=15 // pred_check
          %p145 = pneg %p80
        $region22: #{tpu_custom_call.1} parent=15 // pred_check_branch
          %147 = sbr.rel (%p145) target = $region24
        $region23: #{tpu_custom_call.1} parent=15 // pred_region
          %p148 = scmp.lt.s32.totalorder %s18, 1
          %s149 = scalar_select %p148, %s18, 1
          %p150 = scmp.lt.s32.totalorder %s20, 0
          %s151 = scalar_select %p150, %s20, 0
          %s152 = smul.addr %s149, 8
          %s153 = sadd.s32 %s151, %s152
          %s154 = smul.addr %s153, 8
          %s155 = scalar_lea.vmem %s1, %s154
        $region24: #{tpu_custom_call.1} parent=15 // pred_fallthru
          _
      $region16: #{tpu_custom_call.1} parent=5 // pred_fallthru
        _
      %p156 = scmp.le.s32.totalorder 1, %s11
      %p157 = scmp.lt.s32.totalorder %s11, 3
      %p158 = pnand %p156, %p157
      %p159 = pneg %p158
      // Predicated region
      $region25: #{tpu_custom_call.1} parent=5 // pred_check
        _
      $region26: #{tpu_custom_call.1} parent=5 // pred_check_branch
        %161 = sbr.rel (%p158) target = $region28
      $region27: #{tpu_custom_call.1} parent=5 // pred_region
        %s162 = ssub.s32 %s11, 1
        %p163 = scmp.lt.s32.totalorder %s21, 1
        %s164 = scalar_select %p163, %s21, 1
        %p165 = scmp.lt.s32.totalorder %s22, 0
        %s166 = scalar_select %p165, %s22, 0
        %s167 = sadd.s32 %s166, %s164
        %s168 = smul.addr %s167, 8
        %s169 = scalar_lea.vmem %s0, %s168
        %p170 = pneg %p58
        %p171 = pneg %p55
        %p172 = scmp.lt.s32.totalorder %s21, 1
        %s173 = scalar_select %p172, %s21, 1
        %p174 = scmp.lt.s32.totalorder %s23, 0
        %s175 = scalar_select %p174, %s23, 0
        %s176 = smul.addr %s173, 8
        %s177 = sadd.s32 %s175, %s176
        %s178 = smul.addr %s177, 8
        %s179 = scalar_lea.vmem %s1, %s178
        %p180 = pneg %p86
        %p181 = pneg %p83
        %p182 = pneg %p116
        %p183 = pneg %p113
        %s184 = sand.u32 %s103, 1
        %s185 = scalar_lea.sflag [#allocation3], %s184
        %s186 = sand.u32 %s103, 1
        %s187 = smul.addr %s186, 8
        %s188 = scalar_lea.vmem [#allocation2], %s187
        %p189 = scmp.lt.s32.totalorder %s21, 1
        %s190 = scalar_select %p189, %s21, 1
        %p191 = scmp.lt.s32.totalorder %s22, 0
        %s192 = scalar_select %p191, %s22, 0
        %s193 = sadd.s32 %s192, %s190
        %s194 = smul.addr %s193, 8
        %s195 = scalar_lea.vmem %s0, %s194
        %p196 = scmp.lt.s32.totalorder %s21, 1
        %s197 = scalar_select %p196, %s21, 1
        %p198 = scmp.lt.s32.totalorder %s23, 0
        %s199 = scalar_select %p198, %s23, 0
        %s200 = smul.addr %s197, 8
        %s201 = sadd.s32 %s199, %s200
        %s202 = smul.addr %s201, 8
        %s203 = scalar_lea.vmem %s1, %s202
        %v204 = vld [vmem:[%s195] sm:$0xff]
        %v205 = vld [vmem:[%s203] sm:$0xff]
        %v206 = vld [vmem:[%s203 + $0x8] sm:$0xff]
        %v207 = vld [vmem:[%s203 + $0x10] sm:$0xff]
        %v208 = vld [vmem:[%s203 + $0x18] sm:$0xff]
        %v209 = vld [vmem:[%s203 + $0x20] sm:$0xff]
        %v210 = vld [vmem:[%s203 + $0x28] sm:$0xff]
        %v211 = vld [vmem:[%s203 + $0x30] sm:$0xff]
        %v212 = vld [vmem:[%s203 + $0x38] sm:$0xff]
        %vm213 = vcmask 523264
        %v215 = vsel %vm213, %v204, 0
        %217 = vmatprep.subr.mxu0 0.0
        %218 = vmatpush1.msra.mxu0 0.0
        %219 = vmatprep.subr.mxu0 0.0
        %220 = vmatpush1.msra.mxu0 0.0
        %221 = vmatprep.subr.mxu0 0.0
        %222 = vmatpush1.msra.mxu0 0.0
        %223 = vmatprep.subr.mxu0 0.0
        %224 = vmatpush1.msra.mxu0 0.0
        %225 = vmatprep.subr.mxu0 0.0
        %226 = vmatpush1.msra.mxu0 0.0
        %227 = vmatprep.subr.mxu0 0.0
        %228 = vmatpush1.msra.mxu0 0.0
        %229 = vmatprep.subr.mxu0 0.0
        %230 = vmatpush1.msra.mxu0 0.0
        %231 = vmatprep.subr.mxu0 0.0
        %232 = vmatpush1.msra.mxu0 0.0
        %233 = vmatprep.subr.mxu0 0.0
        %234 = vmatpush1.msra.mxu0 %v212
        %235 = vmatprep.subr.mxu0 0.0
        %236 = vmatpush1.msra.mxu0 %v211
        %237 = vmatprep.subr.mxu0 0.0
        %238 = vmatpush1.msra.mxu0 %v210
        %239 = vmatprep.subr.mxu0 0.0
        %240 = vmatpush1.msra.mxu0 %v209
        %241 = vmatprep.subr.mxu0 0.0
        %242 = vmatpush1.msra.mxu0 %v208
        %243 = vmatprep.subr.mxu0 0.0
        %244 = vmatpush1.msra.mxu0 %v207
        %245 = vmatprep.subr.mxu0 0.0
        %246 = vmatpush1.msra.mxu0 %v206
        %247 = vmatprep.subr.mxu0 0.0
        %248 = vmatpush1.msra.mxu0 %v205
        %249 = vmatprep.subr.mxu0 0.0
        %250 = vmatpush2.msra.mxu0 0.0
        %251 = vmatprep.subr.mxu0 0.0
        %252 = vmatpush2.msra.mxu0 0.0
        %253 = vmatprep.subr.mxu0 0.0
        %254 = vmatpush2.msra.mxu0 0.0
        %255 = vmatprep.subr.mxu0 0.0
        %256 = vmatpush2.msra.mxu0 0.0
        %257 = vmatprep.subr.mxu0 0.0
        %258 = vmatpush2.msra.mxu0 0.0
        %259 = vmatprep.subr.mxu0 0.0
        %260 = vmatpush2.msra.mxu0 0.0
        %261 = vmatprep.subr.mxu0 0.0
        %262 = vmatpush2.msra.mxu0 0.0
        %263 = vmatprep.subr.mxu0 0.0
        %264 = vmatpush2.msra.mxu0 0.0
        %265 = vmatprep.subr.mxu0 0.0
        %266 = vmatpush2.msra.mxu0 0.0
        %267 = vmatprep.subr.mxu0 0.0
        %268 = vmatpush2.msra.mxu0 0.0
        %269 = vmatprep.subr.mxu0 0.0
        %270 = vmatpush2.msra.mxu0 0.0
        %271 = vmatprep.subr.mxu0 0.0
        %272 = vmatpush2.msra.mxu0 0.0
        %273 = vmatprep.subr.mxu0 0.0
        %274 = vmatpush2.msra.mxu0 0.0
        %275 = vmatprep.subr.mxu0 0.0
        %276 = vmatpush2.msra.mxu0 0.0
        %277 = vmatprep.subr.mxu0 0.0
        %278 = vmatpush2.msra.mxu0 0.0
        %279 = vmatprep.subr.mxu0 0.0
        %280 = vmatpush2.msra.mxu0 0.0
        %281 = vmatprep.mubr.f32.mxu0 0.0
        %282 = vmatmul.mubr.f32.gmra.mxu0 %v215
        %v283 = vpop.f32.mrf.mxu0
        %v284 = vadd.f32 0.0, %v283
        %v285 = vpop.f32.mrf.mxu0
        %286 = vdwg.mxu0
        %vm287 = vcmask 64512
        %288 = vst.msk [vmem:[%s188] sm:$0xff] %vm287, %v284
        %s289 = sand.u32 %s103, 1
        %s290 = scalar_lea.sflag [#allocation3], %s289
        %s291 = sand.u32 %s103, 1
        %s292 = smul.addr %s291, 8
        %s293 = scalar_lea.vmem [#allocation2], %s292
        // Predicated region
        $region29: #{tpu_custom_call.1} parent=27 // pred_check
          %p294 = pneg %p113
        $region30: #{tpu_custom_call.1} parent=27 // pred_check_branch
          %296 = sbr.rel (%p294) target = $region32
        $region31: #{tpu_custom_call.1} parent=27 // pred_region
          %s298 = ssub.s32 128, 128
          %299 = vsyncadd %s290, %s298
          %s300 = sadd.s32 %s23, %s22
          %s301 = sadd.s32 %s300, %s21
          %s302 = smul.addr %s301, 128
          %s303 = scalar_lea.hbm %s2, %s302
          %s305 = sshll.u32 %s293, 4
          %s306 = int_to_ptr.vmem [resolvable:$true] %s305
          %308 = dma.vmem_to_hbm [thread:$0]  %s306, 128, %s303, %s290
        $region32: #{tpu_custom_call.1} parent=27 // pred_fallthru
          _
      $region28: #{tpu_custom_call.1} parent=5 // pred_fallthru
        _
      %p309 = scmp.le.s32.totalorder 2, %s11
      // Predicated region
      $region33: #{tpu_custom_call.1} parent=5 // pred_check
        %p310 = pneg %p309
      $region34: #{tpu_custom_call.1} parent=5 // pred_check_branch
        %312 = sbr.rel (%p310) target = $region36
      $region35: #{tpu_custom_call.1} parent=5 // pred_region
        %s313 = ssub.s32 %s11, 2
        // Predicated region
        $region37: #{tpu_custom_call.1} parent=35 // pred_check
          %p314 = pneg %p119
        $region38: #{tpu_custom_call.1} parent=35 // pred_check_branch
          %316 = sbr.rel (%p314) target = $region40
        $region39: #{tpu_custom_call.1} parent=35 // pred_region
          %s317 = sand.u32 %s104, 1
          %s318 = scalar_lea.sflag [#allocation3], %s317
          %s319 = sand.u32 %s104, 1
          %s320 = smul.addr %s319, 8
          %s321 = scalar_lea.vmem [#allocation2], %s320
          %322 = dma.done %s318, 128
        $region40: #{tpu_custom_call.1} parent=35 // pred_fallthru
          _
      $region36: #{tpu_custom_call.1} parent=5 // pred_fallthru
        _
    $region6: #{tpu_custom_call.1} parent=1 // loop_footer
      %s15 = sadd.s32 1, %s11
    $region7: #{tpu_custom_call.1} parent=1 // loop_footer_branch
      %10 = sbr.rel target = $region3
    $region8: #{tpu_custom_call.1} parent=1 // loop_exit
      _
    %323 = vsyncpa [#allocation3], 1
    %s324 = scalar_lea.sflag [#allocation3], 1
    %325 = vsyncpa %s324, 1

</llo_original>
